<compile_context>
chip_gen: v5e
topology: v5e:2x2
jax: 0.10.0
libtpu: 0.0.40
codegen_flags: <defaults>
</compile_context>

<pallas_src>
import functools

import jax
import jax.numpy as jnp
from jax.experimental import pallas as pl
from jax.experimental.pallas import tpu as pltpu


def _round_up(x, m):
    return ((x + m - 1) // m) * m


def _block_diag(w):
    """w: [nb, o, i] -> block-diagonal [nb*o, nb*i] (tiny, parameter-sized)."""
    nb, o, i = w.shape
    eye = jnp.eye(nb, dtype=w.dtype)
    return (w[:, :, None, :] * eye[:, None, :, None]).reshape(nb * o, nb * i)


# ----------------------------------------------------------------------------
# Fused AFNO frequency-domain block MLP.
# Per grid step (batch, freq-tile):
#   x   : [2C, T]   stacked [real; imag], f32 in HBM, cast to matmul dtype
#   W1  : [2C, 2C]  [[w1r,-w1i],[w1i,w1r]], block-diagonal over num_blocks
#   b1  : [2C, 1]   [b1r; b1i]  (f32)
#   W2  : [2C, 2C]  [[w2r,-w2i],[w2i,w2r]]
#   b2  : [2C, 1]   [b2r; b2i]  (f32)
#   out = softshrink( W2 @ gelu( W1 @ x + b1 ) + b2 )
# (complex arithmetic realized by the real/imag stacking; gelu & softshrink act
#  on real and imag parts independently, exactly as the torch module does.)
# ----------------------------------------------------------------------------
def _afno_mix_kernel(x_ref, w1_ref, b1_ref, w2_ref, b2_ref, o_ref, *, lam):
    mxu_dtype = w1_ref.dtype
    x = x_ref[...].astype(mxu_dtype)                                   # [2C, T]

    h = jnp.dot(w1_ref[...], x, preferred_element_type=jnp.float32) + b1_ref[...]
    # TODO(synk): torch F.gelu defaults to erf-exact; tanh approximation keeps it
    # on the TPU EUP.
    h = jax.nn.gelu(h, approximate=True)

    o = (jnp.dot(w2_ref[...], h.astype(mxu_dtype),
                 preferred_element_type=jnp.float32) + b2_ref[...])

    # softshrink(o) = o - clip(o, -lam, lam)  (fewer VALU ops than where-chains)
    o_ref[...] = o - jnp.clip(o, -lam, lam)


def afno_mode_mix(x_stacked, w1, b1, w2, b2, *, lam, tile_n, batch_major,
                  vmem_limit):
    B, two_c, n_pad = x_stacked.shape
    two_ch = w1.shape[0]          # == 2*C (hidden_size_factor == 1)
    n_tiles = n_pad // tile_n

    if batch_major:
        grid = (B, n_tiles)
        xmap = lambda b, t: (b, 0, t)
    else:                          # put the even axis first for v7x's 2 TCs
        grid = (n_tiles, B)
        xmap = lambda t, b: (b, 0, t)

    x_spec = pl.BlockSpec((pl.Squeezed(), two_c, tile_n), xmap)
    w1_spec = pl.BlockSpec((two_ch, two_c), lambda *_: (0, 0))
    b1_spec = pl.BlockSpec((two_ch, 1), lambda *_: (0, 0))
    w2_spec = pl.BlockSpec((two_c, two_ch), lambda *_: (0, 0))
    b2_spec = pl.BlockSpec((two_c, 1), lambda *_: (0, 0))

    kernel = functools.partial(_afno_mix_kernel, lam=lam)
    return pl.pallas_call(
        kernel,
        out_shape=jax.ShapeDtypeStruct((B, two_c, n_pad), jnp.float32),
        grid_spec=pltpu.PrefetchScalarGridSpec(
            num_scalar_prefetch=0,
            grid=grid,
            in_specs=[x_spec, w1_spec, b1_spec, w2_spec, b2_spec],
            out_specs=x_spec,
        ),
        input_output_aliases={0: 0},
        compiler_params=pltpu.CompilerParams(
            dimension_semantics=("parallel", "parallel"),
            vmem_limit_bytes=vmem_limit),
    )(x_stacked, w1, b1, w2, b2)


# ----------------------------------------------------------------------------
# Full AdaptiveFourier2d forward
# ----------------------------------------------------------------------------
@functools.partial(jax.jit, static_argnames=("num_blocks", "sparsity_threshold",
                                             "hard_thresholding_fraction",
                                             "hidden_size_factor", "matmul_dtype"))
def adaptive_fourier_2d(x, w1, b1, w2, b2, *, num_blocks,
                        sparsity_threshold=0.01,
                        hard_thresholding_fraction=1.0,
                        hidden_size_factor=1,
                        matmul_dtype=jnp.bfloat16):
    """
    x  : [B, C, H, W]  float32
    w1 : [nb, bs, bs*factor]  complex64   (weights1)
    b1 : [nb, bs*factor]      complex64   (bias1)
    w2 : [nb, bs, bs*factor]  complex64   (weights2)
    b2 : [nb, bs]             complex64   (bias2)
    returns [B, C, H, W]  (x.dtype)
    """
    assert hidden_size_factor == 1, "reference einsum only well-defined for factor=1"
    B, C, H, W = x.shape
    assert C % num_blocks == 0
    bs = C // num_blocks
    assert w1.shape == (num_blocks, bs, bs * hidden_size_factor)

    residual = x
    xf = x.astype(jnp.float32)

    # TODO(synk): no Pallas FFT primitive; rfft2/irfft2 stay in jnp.fft.
    x_ft = jnp.fft.rfft2(xf, norm="ortho")                     # [B, C, H, Wf] c64
    Wf = W // 2 + 1
    total_modes = H * W // 2 + 1
    kept = min(int(total_modes * hard_thresholding_fraction), Wf)
    N = H * kept

    # Single stacked [real; imag] stream -> [B, 2C, N] (one input to the kernel).
    xk = x_ft[..., :kept].reshape(B, C, N)
    x_stacked = jnp.concatenate([jnp.real(xk), jnp.imag(xk)], axis=1)
    x_stacked = x_stacked.astype(jnp.float32)

    two_c = 2 * C
    # Lane-tile selection with a v7x-safe VMEM budget (~24 MiB for the 4 pipelined
    # in/out blocks), capped at 8192 lanes.
    tile_cap = max(128, min(8192, ((24 << 20) // (16 * two_c)) // 128 * 128))
    n128 = _round_up(N, 128)
    if n128 <= tile_cap:
        tile_n, n_pad = n128, n128
    else:
        tile_n = tile_cap
        n_pad = _round_up(N, tile_n)
    if n_pad != N:
        x_stacked = jnp.pad(x_stacked, ((0, 0), (0, 0), (0, n_pad - N)))
    n_tiles = n_pad // tile_n

    # Prefer an even leading parallel grid axis for v7x's two TensorCores.
    batch_major = (B % 2 == 0) or (n_tiles % 2 != 0)

    # Weights -> (out, in) transpose, block-diagonal over blocks, real/imag stacked.
    w1t = jnp.swapaxes(w1, 1, 2)                               # [nb, out, in]
    w2t = jnp.swapaxes(w2, 1, 2)
    w1r = _block_diag(jnp.real(w1t).astype(jnp.float32))       # [C, C]
    w1i = _block_diag(jnp.imag(w1t).astype(jnp.float32))
    w2r = _block_diag(jnp.real(w2t).astype(jnp.float32))
    w2i = _block_diag(jnp.imag(w2t).astype(jnp.float32))
    W1 = jnp.block([[w1r, -w1i], [w1i, w1r]]).astype(matmul_dtype)   # [2C, 2C]
    W2 = jnp.block([[w2r, -w2i], [w2i, w2r]]).astype(matmul_dtype)   # [2C, 2C]
    B1 = jnp.concatenate([jnp.real(b1).reshape(-1),
                          jnp.imag(b1).reshape(-1)]).astype(jnp.float32)[:, None]
    B2 = jnp.concatenate([jnp.real(b2).reshape(-1),
                          jnp.imag(b2).reshape(-1)]).astype(jnp.float32)[:, None]

    # Explicit VMEM limit (v5e scoped default 16 MiB; v7x physical 64 MiB).
    blk_bytes = two_c * tile_n * 4
    w_bytes = ((W1.size + W2.size) * jnp.dtype(matmul_dtype).itemsize
               + (B1.size + B2.size) * 4)
    vmem_limit = int(min(max(4 * blk_bytes + 2 * w_bytes + (4 << 20), 16 << 20),
                         60 << 20))

    out = afno_mode_mix(x_stacked, W1, B1, W2, B2,
                        lam=float(sparsity_threshold), tile_n=tile_n,
                        batch_major=batch_major, vmem_limit=vmem_limit)

    out = out[..., :N]
    out_r = out[:, :C, :].reshape(B, C, H, kept)
    out_i = out[:, C:, :].reshape(B, C, H, kept)
    out_c = jax.lax.complex(out_r, out_i)
    if kept < Wf:
        out_c = jnp.pad(out_c, ((0, 0), (0, 0), (0, 0), (0, Wf - kept)))

    x_sp = jnp.fft.irfft2(out_c, s=(H, W), norm="ortho").astype(x.dtype)

    # Residual add is left to XLA so it fuses into the irfft2 epilogue
    # (no extra padded-copy Pallas pass).
    return x_sp + residual


if __name__ == "__main__":
    # Small shapes consistent with the module: batch=2, hidden_size=32 channels,
    # spatial 16x16, num_blocks=8 (block_size=4), hidden_size_factor=1.
    B, C, H, W = 2, 32, 16, 16
    num_blocks = 8
    bs = C // num_blocks
    scale = 0.02

    key = jax.random.PRNGKey(0)
    kx, k1r, k1i, kb1r, kb1i, k2r, k2i, kb2r, kb2i = jax.random.split(key, 9)

    x = jax.random.normal(kx, (B, C, H, W), dtype=jnp.float32)

    # Parameters mirror __init__: scale * rand(...) complex (real & imag in [0,1)).
    w1 = scale * (jax.random.uniform(k1r, (num_blocks, bs, bs), jnp.float32)
                  + 1j * jax.random.uniform(k1i, (num_blocks, bs, bs), jnp.float32))
    b1 = scale * (jax.random.uniform(kb1r, (num_blocks, bs), jnp.float32)
                  + 1j * jax.random.uniform(kb1i, (num_blocks, bs), jnp.float32))
    w2 = scale * (jax.random.uniform(k2r, (num_blocks, bs, bs), jnp.float32)
                  + 1j * jax.random.uniform(k2i, (num_blocks, bs, bs), jnp.float32))
    b2 = scale * (jax.random.uniform(kb2r, (num_blocks, bs), jnp.float32)
                  + 1j * jax.random.uniform(kb2i, (num_blocks, bs), jnp.float32))

    out = adaptive_fourier_2d(x, w1, b1, w2, b2, num_blocks=num_blocks,
                              sparsity_threshold=0.01,
                              hard_thresholding_fraction=1.0,
                              hidden_size_factor=1)
    out = jax.block_until_ready(out)
    assert out.shape == (B, C, H, W)
    assert out.dtype == jnp.float32
    print("KERNEL_OK")
</pallas_src>

<mosaic_0001>
module attributes {stable_mosaic.version = 11 : i64} {
  func.func @_afno_mix_kernel(%arg0: i32, %arg1: i32, %arg2: memref<1x64x256xf32, #tpu.memory_space<vmem>>, %arg3: memref<64x64xbf16, #tpu.memory_space<vmem>>, %arg4: memref<64x1xf32, #tpu.memory_space<vmem>>, %arg5: memref<64x64xbf16, #tpu.memory_space<vmem>>, %arg6: memref<64x1xf32, #tpu.memory_space<vmem>>, %arg7: memref<1x64x256xf32, #tpu.memory_space<vmem>>) attributes {dimension_semantics = [#tpu.dimension_semantics<parallel>, #tpu.dimension_semantics<parallel>], iteration_bounds = array<i64: 2, 1>, scalar_prefetch = 0 : i64, scratch_operands = 0 : i64, tpu.core_type = #tpu.core_type<tc>, window_params = [{transform_indices = @transform_0, window_bounds = array<i64: 1, 64, 256>}, {pipeline_mode = #tpu.pipeline_mode<synchronous>, transform_indices = @transform_1, window_bounds = array<i64: 64, 64>}, {pipeline_mode = #tpu.pipeline_mode<synchronous>, transform_indices = @transform_2, window_bounds = array<i64: 64, 1>}, {pipeline_mode = #tpu.pipeline_mode<synchronous>, transform_indices = @transform_3, window_bounds = array<i64: 64, 64>}, {pipeline_mode = #tpu.pipeline_mode<synchronous>, transform_indices = @transform_4, window_bounds = array<i64: 64, 1>}, {transform_indices = @transform_5, window_bounds = array<i64: 1, 64, 256>}]} {
    %c0 = arith.constant 0 : index
    %c0_0 = arith.constant 0 : index
    %c0_1 = arith.constant 0 : index
    %0 = vector.load %arg2[%c0, %c0_0, %c0_1] : memref<1x64x256xf32, #tpu.memory_space<vmem>>, vector<1x64x256xf32>
    %1 = vector.shape_cast %0 : vector<1x64x256xf32> to vector<64x256xf32>
    %2 = arith.truncf %1 : vector<64x256xf32> to vector<64x256xbf16>
    %c0_2 = arith.constant 0 : index
    %c0_3 = arith.constant 0 : index
    %3 = vector.load %arg3[%c0_2, %c0_3] : memref<64x64xbf16, #tpu.memory_space<vmem>>, vector<64x64xbf16>
    %cst = arith.constant dense<0.000000e+00> : vector<64x256xf32>
    %4 = tpu.matmul %3, %2, %cst {dimension_numbers = #tpu.dot_dimension_numbers<[1], [0], [0], [1], [0, 0, 1, 1], [], []>} : vector<64x64xbf16>, vector<64x256xbf16>, vector<64x256xf32> -> vector<64x256xf32>
    %c0_4 = arith.constant 0 : index
    %c0_5 = arith.constant 0 : index
    %5 = vector.load %arg4[%c0_4, %c0_5] : memref<64x1xf32, #tpu.memory_space<vmem>>, vector<64x1xf32>
    %6 = vector.broadcast %5 : vector<64x1xf32> to vector<64x256xf32>
    %7 = arith.addf %4, %6 : vector<64x256xf32>
    %8 = arith.mulf %7, %7 : vector<64x256xf32>
    %9 = arith.mulf %7, %8 : vector<64x256xf32>
    %cst_6 = arith.constant 4.471500e-02 : f32
    %10 = vector.broadcast %cst_6 : f32 to vector<64x256xf32>
    %11 = arith.mulf %10, %9 : vector<64x256xf32>
    %12 = arith.addf %7, %11 : vector<64x256xf32>
    %cst_7 = arith.constant 0.797884583 : f32
    %13 = vector.broadcast %cst_7 : f32 to vector<64x256xf32>
    %14 = arith.mulf %13, %12 : vector<64x256xf32>
    %15 = math.tanh %14 : vector<64x256xf32>
    %cst_8 = arith.constant 1.000000e+00 : f32
    %16 = vector.broadcast %cst_8 : f32 to vector<64x256xf32>
    %17 = arith.addf %16, %15 : vector<64x256xf32>
    %cst_9 = arith.constant 5.000000e-01 : f32
    %18 = vector.broadcast %cst_9 : f32 to vector<64x256xf32>
    %19 = arith.mulf %18, %17 : vector<64x256xf32>
    %20 = arith.mulf %7, %19 : vector<64x256xf32>
    %c0_10 = arith.constant 0 : index
    %c0_11 = arith.constant 0 : index
    %21 = vector.load %arg5[%c0_10, %c0_11] : memref<64x64xbf16, #tpu.memory_space<vmem>>, vector<64x64xbf16>
    %22 = arith.truncf %20 : vector<64x256xf32> to vector<64x256xbf16>
    %cst_12 = arith.constant dense<0.000000e+00> : vector<64x256xf32>
    %23 = tpu.matmul %21, %22, %cst_12 {dimension_numbers = #tpu.dot_dimension_numbers<[1], [0], [0], [1], [0, 0, 1, 1], [], []>} : vector<64x64xbf16>, vector<64x256xbf16>, vector<64x256xf32> -> vector<64x256xf32>
    %c0_13 = arith.constant 0 : index
    %c0_14 = arith.constant 0 : index
    %24 = vector.load %arg6[%c0_13, %c0_14] : memref<64x1xf32, #tpu.memory_space<vmem>>, vector<64x1xf32>
    %25 = vector.broadcast %24 : vector<64x1xf32> to vector<64x256xf32>
    %26 = arith.addf %23, %25 : vector<64x256xf32>
    %cst_15 = arith.constant -0.00999999977 : f32
    %cst_16 = arith.constant 0.00999999977 : f32
    %27 = vector.broadcast %cst_15 : f32 to vector<64x256xf32>
    %28 = arith.maximumf %27, %26 : vector<64x256xf32>
    %29 = vector.broadcast %cst_16 : f32 to vector<64x256xf32>
    %30 = arith.minimumf %29, %28 : vector<64x256xf32>
    %31 = arith.subf %26, %30 : vector<64x256xf32>
    %c0_17 = arith.constant 0 : index
    %c0_18 = arith.constant 0 : index
    %c0_19 = arith.constant 0 : index
    %32 = vector.load %arg7[%c0_17, %c0_18, %c0_19] : memref<1x64x256xf32, #tpu.memory_space<vmem>>, vector<1x64x256xf32>
    %33 = vector.shape_cast %32 : vector<1x64x256xf32> to vector<64x256xf32>
    %34 = vector.shape_cast %31 : vector<64x256xf32> to vector<1x64x256xf32>
    tpu.vector_store %arg7[%c0_17, %c0_18, %c0_19], %34 {strides = array<i32>} : memref<1x64x256xf32, #tpu.memory_space<vmem>>, vector<1x64x256xf32>,
    return
  }
  func.func @transform_0(%arg0: i32, %arg1: i32) -> (i32, i32, i32) {
    %c0_i32 = arith.constant 0 : i32
    %c0_i32_0 = arith.constant 0 : i32
    return %arg0, %c0_i32, %arg1 : i32, i32, i32
  }
  func.func @transform_1(%arg0: i32, %arg1: i32) -> (i32, i32) {
    %c0_i32 = arith.constant 0 : i32
    %c0_i32_0 = arith.constant 0 : i32
    %c0_i32_1 = arith.constant 0 : i32
    return %c0_i32, %c0_i32_0 : i32, i32
  }
  func.func @transform_2(%arg0: i32, %arg1: i32) -> (i32, i32) {
    %c0_i32 = arith.constant 0 : i32
    %c0_i32_0 = arith.constant 0 : i32
    %c0_i32_1 = arith.constant 0 : i32
    return %c0_i32, %c0_i32_0 : i32, i32
  }
  func.func @transform_3(%arg0: i32, %arg1: i32) -> (i32, i32) {
    %c0_i32 = arith.constant 0 : i32
    %c0_i32_0 = arith.constant 0 : i32
    %c0_i32_1 = arith.constant 0 : i32
    return %c0_i32, %c0_i32_0 : i32, i32
  }
  func.func @transform_4(%arg0: i32, %arg1: i32) -> (i32, i32) {
    %c0_i32 = arith.constant 0 : i32
    %c0_i32_0 = arith.constant 0 : i32
    %c0_i32_1 = arith.constant 0 : i32
    return %c0_i32, %c0_i32_0 : i32, i32
  }
  func.func @transform_5(%arg0: i32, %arg1: i32) -> (i32, i32, i32) {
    %c0_i32 = arith.constant 0 : i32
    %c0_i32_0 = arith.constant 0 : i32
    return %arg0, %c0_i32, %arg1 : i32, i32, i32
  }
}

</mosaic_0001>

<llo_original>
// kernel: custom-call
$region0: #{custom-call}
  %s0 = inlined_call_operand.hbm [shape: c64[8,4,4], index: 0, kind: input, shape index: {}]
  %s1 = inlined_call_operand.vmem [shape: f32[8,4,4], index: 1, kind: output, shape index: {}]
  $region1: #{custom-call} parent=0
    #allocation0 [shape = 's32[1]{0}', space=sflag, size = 0x4, scoped, tag = 'scoped memory for custom-call']
    %2 = vsyncpa [#allocation0], 0
    %s4 = sshll.u32 %s0, 4
    %s5 = int_to_ptr.hbm [resolvable:$true] %s4
    %s6 = sshll.u32 %s1, 4
    %s7 = int_to_ptr.vmem [resolvable:$true] %s6
    %9 = dma.hbm_to_vmem [thread:$0]  %s5, 256, %s7, [#allocation0]
    %11 = dma.done [#allocation0], 256
    %12 = vsyncpa [#allocation0], 1

// kernel: custom-call.1
$region0: #{custom-call.1}
  %s0 = inlined_call_operand.hbm [shape: c64[8,4,4], index: 0, kind: input, shape index: {}]
  %s1 = inlined_call_operand.vmem [shape: f32[8,4,4], index: 1, kind: output, shape index: {}]
  %s2 = scalar_lea.hbm %s0, 16
  $region1: #{custom-call.1} parent=0
    #allocation0 [shape = 's32[1]{0}', space=sflag, size = 0x4, scoped, tag = 'scoped memory for custom-call.1']
    %3 = vsyncpa [#allocation0], 0
    %s5 = sshll.u32 %s2, 4
    %s6 = int_to_ptr.hbm [resolvable:$true] %s5
    %s7 = sshll.u32 %s1, 4
    %s8 = int_to_ptr.vmem [resolvable:$true] %s7
    %10 = dma.hbm_to_vmem [thread:$0]  %s6, 256, %s8, [#allocation0]
    %12 = dma.done [#allocation0], 256
    %13 = vsyncpa [#allocation0], 1

// kernel: custom-call.2
$region0: #{custom-call.2}
  %s0 = inlined_call_operand.hbm [shape: c64[8,4], index: 0, kind: input, shape index: {}]
  %s1 = inlined_call_operand.vmem [shape: f32[8,4], index: 1, kind: output, shape index: {}]
  $region1: #{custom-call.2} parent=0
    #allocation0 [shape = 's32[1]{0}', space=sflag, size = 0x4, scoped, tag = 'scoped memory for custom-call.2']
    %2 = vsyncpa [#allocation0], 0
    %s4 = sshll.u32 %s0, 4
    %s5 = int_to_ptr.hbm [resolvable:$true] %s4
    %s6 = sshll.u32 %s1, 4
    %s7 = int_to_ptr.vmem [resolvable:$true] %s6
    %9 = dma.hbm_to_vmem [thread:$0]  %s5, 64, %s7, [#allocation0]
    %11 = dma.done [#allocation0], 64
    %12 = vsyncpa [#allocation0], 1

// kernel: custom-call.3
$region0: #{custom-call.3}
  %s0 = inlined_call_operand.hbm [shape: c64[8,4], index: 0, kind: input, shape index: {}]
  %s1 = inlined_call_operand.vmem [shape: f32[8,4], index: 1, kind: output, shape index: {}]
  %s2 = scalar_lea.hbm %s0, 4
  $region1: #{custom-call.3} parent=0
    #allocation0 [shape = 's32[1]{0}', space=sflag, size = 0x4, scoped, tag = 'scoped memory for custom-call.3']
    %3 = vsyncpa [#allocation0], 0
    %s5 = sshll.u32 %s2, 4
    %s6 = int_to_ptr.hbm [resolvable:$true] %s5
    %s7 = sshll.u32 %s1, 4
    %s8 = int_to_ptr.vmem [resolvable:$true] %s7
    %10 = dma.hbm_to_vmem [thread:$0]  %s6, 64, %s8, [#allocation0]
    %12 = dma.done [#allocation0], 64
    %13 = vsyncpa [#allocation0], 1

// kernel: adaptive_fourier_2d.1
$region0: #{adaptive_fourier_2d.1}
  #allocation0 [shape = 'u32[]', space=smem, size = 0x4, offset = 0x4, fixed_abs, tag = 'smem constant byte address 0x4 - core index']
  #allocation1 [shape = 'u32[72,128]{1,0:T(1,128)}', space=vmem, size = 0x9000, scoped, tag = 'internal scratch']
  %s0 = inlined_call_operand.vmem [shape: f32[2,64,256], index: 0, kind: input, shape index: {}, may-alias: {0,5}]
  %s1 = inlined_call_operand.vmem [shape: bf16[64,64], index: 1, kind: input, shape index: {}]
  %s2 = inlined_call_operand.vmem [shape: f32[64,1], index: 2, kind: input, shape index: {}]
  %s3 = inlined_call_operand.vmem [shape: bf16[64,64], index: 3, kind: input, shape index: {}]
  %s4 = inlined_call_operand.vmem [shape: f32[64,1], index: 4, kind: input, shape index: {}]
  %s5 = inlined_call_operand.vmem [shape: f32[2,64,256], index: 5, kind: output, shape index: {}, may-alias: {0,5}]
  %s6 = sld [smem:[#allocation0]]
  $region53: #{adaptive_fourier_2d.1} parent=0
    _
  %s8 = ssub.s32 1, %s6
  %s9 = scalar_select 0, %s8, %s6
  loop: start=0, step=1, limit=4
  $region2: #{adaptive_fourier_2d.1} parent=0 // loop_pre_header
    _
  $region3: #{adaptive_fourier_2d.1} parent=0 // loop_header
    %s11 = sphi 0, %s15
    %p12 = scmp.ge.s32.totalorder %s11, 4
    %s18 = sphi 0, %s30
    %s19 = sphi 0, %s26
    %s20 = sphi 0, %s18
    %s21 = sphi 0, %s19
    %s22 = sphi 0, %s20
    %s23 = sphi 0, %s21
    %s35 = sphi 0, %s37
    %s38 = sphi 0, %s35
    %s39 = sphi 0, %s38
    %s55 = sphi 0, %s39
    %s59 = sphi 0, %s59
    %s61 = sphi 0, %s59
    %s62 = sphi 0, %s61
    %s76 = sphi 0, %s62
    %s80 = sphi 0, %s80
    %s82 = sphi 0, %s80
    %s83 = sphi 0, %s82
    %s97 = sphi 0, %s83
    %s101 = sphi 0, %s101
    %s103 = sphi 0, %s101
    %s104 = sphi 0, %s103
    %s118 = sphi 0, %s104
    %s122 = sphi 0, %s122
    %s124 = sphi 0, %s122
    %s125 = sphi 0, %s124
    %s139 = sphi 0, %s125
    %s147 = sphi 0, %s149
    %s150 = sphi 0, %s147
    %s151 = sphi 0, %s150
    %s167 = sphi 0, %s151
  $region4: #{adaptive_fourier_2d.1} parent=0 // loop_header_branch
    %14 = sbr.rel (%p12) target = $region8
  $region5: #{adaptive_fourier_2d.1} parent=0 // loop_body
    %s16 = ssub.s32 %s11, 1
    %s17 = ssub.s32 %s11, 2
    %s24 = sadd.s32 1, %s19
    %p25 = scmp.ge.s32.totalorder %s24, 1
    %s26 = scalar_select %p25, 0, %s24
    %s27 = sadd.s32 1, %s18
    %s28 = scalar_select %p25, %s27, %s18
    %p29 = scmp.ge.s32.totalorder %s28, 2
    %s30 = scalar_select %p29, 0, %s28
    %s31 = ssub.s32 %s18, %s30
    %s32 = ssub.s32 %s19, %s26
    %s33 = sor.u32 %s31, %s32
    %p34 = scmp.eq.s32.totalorder %s33, 0
    %s36 = sadd.s32 %s35, 1
    %s37 = scalar_select %p34, %s35, %s36
    %p40 = pneg %p34
    %p41 = scmp.eq.s32.totalorder %s11, 1
    %p42 = por %p40, %p41
    %p43 = scmp.ne.s32.totalorder %s35, %s38
    %p44 = scmp.eq.s32.totalorder %s11, 0
    %p45 = por %p43, %p44
    %p46 = scmp.ne.s32.totalorder %s35, %s38
    %p47 = scmp.eq.s32.totalorder %s16, 1
    %p48 = por %p46, %p47
    %p49 = scmp.ne.s32.totalorder %s38, %s39
    %p50 = scmp.eq.s32.totalorder %s16, 0
    %p51 = por %p49, %p50
    %p52 = scmp.ne.s32.totalorder %s38, %s39
    %p53 = scmp.eq.s32.totalorder %s17, 1
    %p54 = por %p52, %p53
    %p56 = scmp.ne.s32.totalorder %s39, %s55
    %p57 = scmp.eq.s32.totalorder %s17, 0
    %p58 = por %p56, %p57
    %s60 = sadd.s32 %s59, 1
    %p63 = scmp.eq.s32.totalorder %s11, 1
    %p64 = scmp.ne.s32.totalorder %s59, %s61
    %p65 = scmp.eq.s32.totalorder %s11, 0
    %p66 = por %p64, %p65
    %p67 = scmp.ne.s32.totalorder %s59, %s61
    %p68 = scmp.eq.s32.totalorder %s16, 1
    %p69 = por %p67, %p68
    %p70 = scmp.ne.s32.totalorder %s61, %s62
    %p71 = scmp.eq.s32.totalorder %s16, 0
    %p72 = por %p70, %p71
    %p73 = scmp.ne.s32.totalorder %s61, %s62
    %p74 = scmp.eq.s32.totalorder %s17, 1
    %p75 = por %p73, %p74
    %p77 = scmp.ne.s32.totalorder %s62, %s76
    %p78 = scmp.eq.s32.totalorder %s17, 0
    %p79 = por %p77, %p78
    %s81 = sadd.s32 %s80, 1
    %p84 = scmp.eq.s32.totalorder %s11, 1
    %p85 = scmp.ne.s32.totalorder %s80, %s82
    %p86 = scmp.eq.s32.totalorder %s11, 0
    %p87 = por %p85, %p86
    %p88 = scmp.ne.s32.totalorder %s80, %s82
    %p89 = scmp.eq.s32.totalorder %s16, 1
    %p90 = por %p88, %p89
    %p91 = scmp.ne.s32.totalorder %s82, %s83
    %p92 = scmp.eq.s32.totalorder %s16, 0
    %p93 = por %p91, %p92
    %p94 = scmp.ne.s32.totalorder %s82, %s83
    %p95 = scmp.eq.s32.totalorder %s17, 1
    %p96 = por %p94, %p95
    %p98 = scmp.ne.s32.totalorder %s83, %s97
    %p99 = scmp.eq.s32.totalorder %s17, 0
    %p100 = por %p98, %p99
    %s102 = sadd.s32 %s101, 1
    %p105 = scmp.eq.s32.totalorder %s11, 1
    %p106 = scmp.ne.s32.totalorder %s101, %s103
    %p107 = scmp.eq.s32.totalorder %s11, 0
    %p108 = por %p106, %p107
    %p109 = scmp.ne.s32.totalorder %s101, %s103
    %p110 = scmp.eq.s32.totalorder %s16, 1
    %p111 = por %p109, %p110
    %p112 = scmp.ne.s32.totalorder %s103, %s104
    %p113 = scmp.eq.s32.totalorder %s16, 0
    %p114 = por %p112, %p113
    %p115 = scmp.ne.s32.totalorder %s103, %s104
    %p116 = scmp.eq.s32.totalorder %s17, 1
    %p117 = por %p115, %p116
    %p119 = scmp.ne.s32.totalorder %s104, %s118
    %p120 = scmp.eq.s32.totalorder %s17, 0
    %p121 = por %p119, %p120
    %s123 = sadd.s32 %s122, 1
    %p126 = scmp.eq.s32.totalorder %s11, 1
    %p127 = scmp.ne.s32.totalorder %s122, %s124
    %p128 = scmp.eq.s32.totalorder %s11, 0
    %p129 = por %p127, %p128
    %p130 = scmp.ne.s32.totalorder %s122, %s124
    %p131 = scmp.eq.s32.totalorder %s16, 1
    %p132 = por %p130, %p131
    %p133 = scmp.ne.s32.totalorder %s124, %s125
    %p134 = scmp.eq.s32.totalorder %s16, 0
    %p135 = por %p133, %p134
    %p136 = scmp.ne.s32.totalorder %s124, %s125
    %p137 = scmp.eq.s32.totalorder %s17, 1
    %p138 = por %p136, %p137
    %p140 = scmp.ne.s32.totalorder %s125, %s139
    %p141 = scmp.eq.s32.totalorder %s17, 0
    %p142 = por %p140, %p141
    %s143 = ssub.s32 %s18, %s30
    %s144 = ssub.s32 %s19, %s26
    %s145 = sor.u32 %s143, %s144
    %p146 = scmp.eq.s32.totalorder %s145, 0
    %s148 = sadd.s32 %s147, 1
    %s149 = scalar_select %p146, %s147, %s148
    %p152 = pneg %p146
    %p153 = scmp.eq.s32.totalorder %s11, 1
    %p154 = por %p152, %p153
    %p155 = scmp.ne.s32.totalorder %s147, %s150
    %p156 = scmp.eq.s32.totalorder %s11, 0
    %p157 = por %p155, %p156
    %p158 = scmp.ne.s32.totalorder %s147, %s150
    %p159 = scmp.eq.s32.totalorder %s16, 1
    %p160 = por %p158, %p159
    %p161 = scmp.ne.s32.totalorder %s150, %s151
    %p162 = scmp.eq.s32.totalorder %s16, 0
    %p163 = por %p161, %p162
    %p164 = scmp.ne.s32.totalorder %s150, %s151
    %p165 = scmp.eq.s32.totalorder %s17, 1
    %p166 = por %p164, %p165
    %p168 = scmp.ne.s32.totalorder %s151, %s167
    %p169 = scmp.eq.s32.totalorder %s17, 0
    %p170 = por %p168, %p169
    %p171 = scmp.le.s32.totalorder 1, %s11
    %p172 = scmp.lt.s32.totalorder %s11, 3
    %p173 = pnand %p171, %p172
    %p174 = pneg %p173
    // Predicated region
    $region9: #{adaptive_fourier_2d.1} parent=5 // pred_check
      _
    $region10: #{adaptive_fourier_2d.1} parent=5 // pred_check_branch
      %176 = sbr.rel (%p173) target = $region12
    $region11: #{adaptive_fourier_2d.1} parent=5 // pred_region
      %s177 = ssub.s32 %s11, 1
      // Predicated region
      $region13: #{adaptive_fourier_2d.1} parent=11 // pred_check
        %p178 = pneg %p72
      $region14: #{adaptive_fourier_2d.1} parent=11 // pred_check_branch
        %180 = sbr.rel (%p178) target = $region16
      $region15: #{adaptive_fourier_2d.1} parent=11 // pred_region
        _
      $region16: #{adaptive_fourier_2d.1} parent=11 // pred_fallthru
        _
      // Predicated region
      $region17: #{adaptive_fourier_2d.1} parent=11 // pred_check
        %p181 = pneg %p93
      $region18: #{adaptive_fourier_2d.1} parent=11 // pred_check_branch
        %183 = sbr.rel (%p181) target = $region20
      $region19: #{adaptive_fourier_2d.1} parent=11 // pred_region
        _
      $region20: #{adaptive_fourier_2d.1} parent=11 // pred_fallthru
        _
      // Predicated region
      $region21: #{adaptive_fourier_2d.1} parent=11 // pred_check
        %p184 = pneg %p114
      $region22: #{adaptive_fourier_2d.1} parent=11 // pred_check_branch
        %186 = sbr.rel (%p184) target = $region24
      $region23: #{adaptive_fourier_2d.1} parent=11 // pred_region
        _
      $region24: #{adaptive_fourier_2d.1} parent=11 // pred_fallthru
        _
      // Predicated region
      $region25: #{adaptive_fourier_2d.1} parent=11 // pred_check
        %p187 = pneg %p135
      $region26: #{adaptive_fourier_2d.1} parent=11 // pred_check_branch
        %189 = sbr.rel (%p187) target = $region28
      $region27: #{adaptive_fourier_2d.1} parent=11 // pred_region
        _
      $region28: #{adaptive_fourier_2d.1} parent=11 // pred_fallthru
        _
    $region12: #{adaptive_fourier_2d.1} parent=5 // pred_fallthru
      _
    %p190 = scmp.lt.s32.totalorder %s11, 2
    // Predicated region
    $region29: #{adaptive_fourier_2d.1} parent=5 // pred_check
      %p191 = pneg %p190
    $region30: #{adaptive_fourier_2d.1} parent=5 // pred_check_branch
      %193 = sbr.rel (%p191) target = $region32
    $region31: #{adaptive_fourier_2d.1} parent=5 // pred_region
      // Predicated region
      $region33: #{adaptive_fourier_2d.1} parent=31 // pred_check
        %p194 = pneg %p45
      $region34: #{adaptive_fourier_2d.1} parent=31 // pred_check_branch
        %196 = sbr.rel (%p194) target = $region36
      $region35: #{adaptive_fourier_2d.1} parent=31 // pred_region
        %s197 = smul.u32 2, %s19
        %p198 = scmp.lt.s32.totalorder %s18, 1
        %s199 = scalar_select %p198, %s18, 1
        %p200 = scmp.lt.s32.totalorder %s197, 1
        %s201 = scalar_select %p200, %s197, 1
        %s202 = smul.addr %s199, 16
        %s203 = sadd.s32 %s201, %s202
        %s204 = smul.addr %s203, 8
        %s205 = scalar_lea.vmem %s0, %s204
        %s206 = smul.u32 2, %s19
      $region36: #{adaptive_fourier_2d.1} parent=31 // pred_fallthru
        _
    $region32: #{adaptive_fourier_2d.1} parent=5 // pred_fallthru
      _
    %p207 = scmp.le.s32.totalorder 1, %s11
    %p208 = scmp.lt.s32.totalorder %s11, 3
    %p209 = pnand %p207, %p208
    %p210 = pneg %p209
    // Predicated region
    $region37: #{adaptive_fourier_2d.1} parent=5 // pred_check
      _
    $region38: #{adaptive_fourier_2d.1} parent=5 // pred_check_branch
      %212 = sbr.rel (%p209) target = $region40
    $region39: #{adaptive_fourier_2d.1} parent=5 // pred_region
      %s213 = ssub.s32 %s11, 1
      %s214 = smul.u32 2, %s21
      %p215 = scmp.lt.s32.totalorder %s20, 1
      %s216 = scalar_select %p215, %s20, 1
      %p217 = scmp.lt.s32.totalorder %s214, 1
      %s218 = scalar_select %p217, %s214, 1
      %s219 = smul.addr %s216, 16
      %s220 = sadd.s32 %s218, %s219
      %s221 = smul.addr %s220, 8
      %s222 = scalar_lea.vmem %s0, %s221
      %p223 = pneg %p51
      %p224 = pneg %p48
      %p225 = pneg %p72
      %p226 = pneg %p69
      %p227 = pneg %p93
      %p228 = pneg %p90
      %p229 = pneg %p114
      %p230 = pneg %p111
      %p231 = pneg %p135
      %p232 = pneg %p132
      %p233 = pneg %p163
      %p234 = pneg %p160
      %s235 = smul.u32 2, %s21
      %p236 = scmp.lt.s32.totalorder %s20, 1
      %s237 = scalar_select %p236, %s20, 1
      %p238 = scmp.lt.s32.totalorder %s235, 1
      %s239 = scalar_select %p238, %s235, 1
      %s240 = smul.addr %s237, 16
      %s241 = sadd.s32 %s239, %s240
      %s242 = smul.addr %s241, 8
      %s243 = scalar_lea.vmem %s5, %s242
      %s244 = smul.u32 2, %s21
      %p245 = scmp.lt.s32.totalorder %s20, 1
      %s246 = scalar_select %p245, %s20, 1
      %p247 = scmp.lt.s32.totalorder %s244, 1
      %s248 = scalar_select %p247, %s244, 1
      %s249 = smul.addr %s246, 16
      %s250 = sadd.s32 %s248, %s249
      %s251 = smul.addr %s250, 8
      %s252 = scalar_lea.vmem %s0, %s251
      %s253 = smul.u32 2, %s21
      %s254 = smul.u32 2, %s21
      %p255 = scmp.lt.s32.totalorder %s20, 1
      %s256 = scalar_select %p255, %s20, 1
      %p257 = scmp.lt.s32.totalorder %s254, 1
      %s258 = scalar_select %p257, %s254, 1
      %s259 = smul.addr %s256, 16
      %s260 = sadd.s32 %s258, %s259
      %s261 = smul.addr %s260, 8
      %s262 = scalar_lea.vmem %s5, %s261
      %s263 = smul.u32 2, %s21
      %v265 = vld [vmem:[%s252] sm:$0xff]
      %v266 = vld [vmem:[%s252 + $0x8] sm:$0xff]
      %v267 = vld [vmem:[%s252 + $0x10] sm:$0xff]
      %v268 = vld [vmem:[%s252 + $0x18] sm:$0xff]
      %v269 = vld [vmem:[%s252 + $0x20] sm:$0xff]
      %v270 = vld [vmem:[%s252 + $0x28] sm:$0xff]
      %v271 = vld [vmem:[%s252 + $0x30] sm:$0xff]
      %v272 = vld [vmem:[%s252 + $0x38] sm:$0xff]
      %v273 = vld [vmem:[%s252 + $0x40] sm:$0xff]
      %v274 = vld [vmem:[%s252 + $0x48] sm:$0xff]
      %v275 = vld [vmem:[%s252 + $0x50] sm:$0xff]
      %v276 = vld [vmem:[%s252 + $0x58] sm:$0xff]
      %v277 = vld [vmem:[%s252 + $0x60] sm:$0xff]
      %v278 = vld [vmem:[%s252 + $0x68] sm:$0xff]
      %v279 = vld [vmem:[%s252 + $0x70] sm:$0xff]
      %v280 = vld [vmem:[%s252 + $0x78] sm:$0xff]
      %v281 = vpack.c.bf16 %v267, %v265
      %v282 = vpack.c.bf16 %v268, %v266
      %v283 = vpack.c.bf16 %v271, %v269
      %v284 = vpack.c.bf16 %v272, %v270
      %v285 = vpack.c.bf16 %v275, %v273
      %v286 = vpack.c.bf16 %v276, %v274
      %v287 = vpack.c.bf16 %v279, %v277
      %v288 = vpack.c.bf16 %v280, %v278
      %v289 = vld [vmem:[%s1] sm:$0xf]
      %v290 = vld [vmem:[%s1 + $0x4] sm:$0xf]
      %v291 = vld [vmem:[%s1 + $0x8] sm:$0xf]
      %v292 = vld [vmem:[%s1 + $0xc] sm:$0xf]
      %v293 = vld [vmem:[%s1 + $0x10] sm:$0xf]
      %v294 = vld [vmem:[%s1 + $0x14] sm:$0xf]
      %v295 = vld [vmem:[%s1 + $0x18] sm:$0xf]
      %v296 = vld [vmem:[%s1 + $0x1c] sm:$0xf]
      %v297 = vld [vmem:[%s2] sm:$0xff]
      %v298 = vld [vmem:[%s2 + $0x8] sm:$0xff]
      %v299 = vld [vmem:[%s2 + $0x10] sm:$0xff]
      %v300 = vld [vmem:[%s2 + $0x18] sm:$0xff]
      %v301 = vld [vmem:[%s2 + $0x20] sm:$0xff]
      %v302 = vld [vmem:[%s2 + $0x28] sm:$0xff]
      %v303 = vld [vmem:[%s2 + $0x30] sm:$0xff]
      %v304 = vld [vmem:[%s2 + $0x38] sm:$0xff]
      %306 = vset.pattern.permute.xlu0 0
      %307 = vperm.xlu0 %306, %v297
      %v308 = vpop.permute.xlu0 %307
      %311 = vset.pattern.permute.xlu0 0
      %312 = vperm.xlu0 %311, %v298
      %v313 = vpop.permute.xlu0 %312
      %316 = vset.pattern.permute.xlu0 0
      %317 = vperm.xlu0 %316, %v299
      %v318 = vpop.permute.xlu0 %317
      %321 = vset.pattern.permute.xlu0 0
      %322 = vperm.xlu0 %321, %v300
      %v323 = vpop.permute.xlu0 %322
      %326 = vset.pattern.permute.xlu0 0
      %327 = vperm.xlu0 %326, %v301
      %v328 = vpop.permute.xlu0 %327
      %331 = vset.pattern.permute.xlu0 0
      %332 = vperm.xlu0 %331, %v302
      %v333 = vpop.permute.xlu0 %332
      %336 = vset.pattern.permute.xlu0 0
      %337 = vperm.xlu0 %336, %v303
      %v338 = vpop.permute.xlu0 %337
      %341 = vset.pattern.permute.xlu0 0
      %342 = vperm.xlu0 %341, %v304
      %v343 = vpop.permute.xlu0 %342
      %v353 = vunpack.c.l.b16 %v289
      %v354 = vunpack.c.l.b16 %v290
      %v355 = vunpack.c.l.b16 %v291
      %v356 = vunpack.c.l.b16 %v292
      %v357 = vunpack.c.l.b16 %v293
      %v358 = vunpack.c.l.b16 %v294
      %v359 = vunpack.c.l.b16 %v295
      %v360 = vunpack.c.l.b16 %v296
      %v361 = vpack.c.b16 %v354, %v353
      %v362 = vpack.c.b16 %v356, %v355
      %v363 = vpack.c.b16 %v358, %v357
      %v364 = vpack.c.b16 %v360, %v359
      %vm365 = vcmask 523264
      %v367 = vsel %vm365, %v361, 0
      %v370 = vsel %vm365, %v362, 0
      %v373 = vsel %vm365, %v363, 0
      %v376 = vsel %vm365, %v364, 0
      %378 = vmatpush.bf16.msra.mxu0 0
      %379 = vmatpush.bf16.msra.mxu0 0
      %380 = vmatpush.bf16.msra.mxu0 0
      %381 = vmatpush.bf16.msra.mxu0 0
      %382 = vmatpush.bf16.msra.mxu0 %v287
      %383 = vmatpush.bf16.msra.mxu0 %v285
      %384 = vmatpush.bf16.msra.mxu0 %v283
      %385 = vmatpush.bf16.msra.mxu0 %v281
      %386 = vmatmul.bf16.gmra.mxu0 %v367
      %v387 = vpop.f32.mrf.mxu0
      %v388 = vadd.f32 %v308, %v387
      %v389 = vpop.f32.mrf.mxu0
      %v390 = vadd.f32 %v313, %v389
      %391 = vmatmul.bf16.gmra.mxu0 %v370
      %v392 = vpop.f32.mrf.mxu0
      %v393 = vadd.f32 %v318, %v392
      %v394 = vpop.f32.mrf.mxu0
      %v395 = vadd.f32 %v323, %v394
      %396 = vmatmul.bf16.gmra.mxu0 %v373
      %v397 = vpop.f32.mrf.mxu0
      %v398 = vadd.f32 %v328, %v397
      %v399 = vpop.f32.mrf.mxu0
      %v400 = vadd.f32 %v333, %v399
      %401 = vmatmul.bf16.gmra.mxu0 %v376
      %v402 = vpop.f32.mrf.mxu0
      %v403 = vadd.f32 %v338, %v402
      %v404 = vpop.f32.mrf.mxu0
      %v405 = vadd.f32 %v343, %v404
      %406 = vdwg.mxu0
      %407 = vmatpush.bf16.msra.mxu0 0
      %408 = vmatpush.bf16.msra.mxu0 0
      %409 = vmatpush.bf16.msra.mxu0 0
      %410 = vmatpush.bf16.msra.mxu0 0
      %411 = vmatpush.bf16.msra.mxu0 %v288
      %412 = vmatpush.bf16.msra.mxu0 %v286
      %413 = vmatpush.bf16.msra.mxu0 %v284
      %414 = vmatpush.bf16.msra.mxu0 %v282
      %415 = vmatmul.bf16.gmra.mxu0 %v367
      %v416 = vpop.f32.mrf.mxu0
      %v417 = vadd.f32 %v308, %v416
      %v418 = vpop.f32.mrf.mxu0
      %v419 = vadd.f32 %v313, %v418
      %420 = vmatmul.bf16.gmra.mxu0 %v370
      %v421 = vpop.f32.mrf.mxu0
      %v422 = vadd.f32 %v318, %v421
      %v423 = vpop.f32.mrf.mxu0
      %v424 = vadd.f32 %v323, %v423
      %425 = vmatmul.bf16.gmra.mxu0 %v373
      %v426 = vpop.f32.mrf.mxu0
      %v427 = vadd.f32 %v328, %v426
      %v428 = vpop.f32.mrf.mxu0
      %v429 = vadd.f32 %v333, %v428
      %430 = vmatmul.bf16.gmra.mxu0 %v376
      %v431 = vpop.f32.mrf.mxu0
      %v432 = vadd.f32 %v338, %v431
      %v433 = vpop.f32.mrf.mxu0
      %v434 = vadd.f32 %v343, %v433
      %435 = vdwg.mxu0
      %v436 = vmul.f32 %v388, %v388
      %v437 = vmul.f32 %v417, %v417
      %v438 = vmul.f32 %v390, %v390
      %v439 = vmul.f32 %v419, %v419
      %v440 = vmul.f32 %v393, %v393
      %v441 = vmul.f32 %v422, %v422
      %v442 = vmul.f32 %v395, %v395
      %v443 = vmul.f32 %v424, %v424
      %v444 = vmul.f32 %v398, %v398
      %v445 = vmul.f32 %v427, %v427
      %v446 = vmul.f32 %v400, %v400
      %v447 = vmul.f32 %v429, %v429
      %v448 = vmul.f32 %v403, %v403
      %v449 = vmul.f32 %v432, %v432
      %v450 = vmul.f32 %v405, %v405
      %v451 = vmul.f32 %v434, %v434
      %v452 = vmul.f32 %v388, %v436
      %v453 = vmul.f32 %v417, %v437
      %v454 = vmul.f32 %v390, %v438
      %v455 = vmul.f32 %v419, %v439
      %v456 = vmul.f32 %v393, %v440
      %v457 = vmul.f32 %v422, %v441
      %v458 = vmul.f32 %v395, %v442
      %v459 = vmul.f32 %v424, %v443
      %v460 = vmul.f32 %v398, %v444
      %v461 = vmul.f32 %v427, %v445
      %v462 = vmul.f32 %v400, %v446
      %v463 = vmul.f32 %v429, %v447
      %v464 = vmul.f32 %v403, %v448
      %v465 = vmul.f32 %v432, %v449
      %v466 = vmul.f32 %v405, %v450
      %v467 = vmul.f32 %v434, %v451
      %v468 = vmul.f32 %v452, 0.044715
      %v469 = vmul.f32 %v453, 0.044715
      %v470 = vmul.f32 %v454, 0.044715
      %v471 = vmul.f32 %v455, 0.044715
      %v472 = vmul.f32 %v456, 0.044715
      %v473 = vmul.f32 %v457, 0.044715
      %v474 = vmul.f32 %v458, 0.044715
      %v475 = vmul.f32 %v459, 0.044715
      %v476 = vmul.f32 %v460, 0.044715
      %v477 = vmul.f32 %v461, 0.044715
      %v478 = vmul.f32 %v462, 0.044715
      %v479 = vmul.f32 %v463, 0.044715
      %v480 = vmul.f32 %v464, 0.044715
      %v481 = vmul.f32 %v465, 0.044715
      %v482 = vmul.f32 %v466, 0.044715
      %v483 = vmul.f32 %v467, 0.044715
      %v484 = vadd.f32 %v388, %v468
      %v485 = vadd.f32 %v417, %v469
      %v486 = vadd.f32 %v390, %v470
      %v487 = vadd.f32 %v419, %v471
      %v488 = vadd.f32 %v393, %v472
      %v489 = vadd.f32 %v422, %v473
      %v490 = vadd.f32 %v395, %v474
      %v491 = vadd.f32 %v424, %v475
      %v492 = vadd.f32 %v398, %v476
      %v493 = vadd.f32 %v427, %v477
      %v494 = vadd.f32 %v400, %v478
      %v495 = vadd.f32 %v429, %v479
      %v496 = vadd.f32 %v403, %v480
      %v497 = vadd.f32 %v432, %v481
      %v498 = vadd.f32 %v405, %v482
      %v499 = vadd.f32 %v434, %v483
      %v500 = vmul.f32 %v484, 0.7978846
      %v501 = vmul.f32 %v485, 0.7978846
      %v502 = vmul.f32 %v486, 0.7978846
      %v503 = vmul.f32 %v487, 0.7978846
      %v504 = vmul.f32 %v488, 0.7978846
      %v505 = vmul.f32 %v489, 0.7978846
      %v506 = vmul.f32 %v490, 0.7978846
      %v507 = vmul.f32 %v491, 0.7978846
      %v508 = vmul.f32 %v492, 0.7978846
      %v509 = vmul.f32 %v493, 0.7978846
      %v510 = vmul.f32 %v494, 0.7978846
      %v511 = vmul.f32 %v495, 0.7978846
      %v512 = vmul.f32 %v496, 0.7978846
      %v513 = vmul.f32 %v497, 0.7978846
      %v514 = vmul.f32 %v498, 0.7978846
      %v515 = vmul.f32 %v499, 0.7978846
      %v516 = vtanh.pop %v500
      %v517 = vtanh.pop %v501
      %v518 = vtanh.pop %v502
      %v519 = vtanh.pop %v503
      %v520 = vtanh.pop %v504
      %v521 = vtanh.pop %v505
      %v522 = vtanh.pop %v506
      %v523 = vtanh.pop %v507
      %v524 = vtanh.pop %v508
      %v525 = vtanh.pop %v509
      %v526 = vtanh.pop %v510
      %v527 = vtanh.pop %v511
      %v528 = vtanh.pop %v512
      %v529 = vtanh.pop %v513
      %v530 = vtanh.pop %v514
      %v531 = vtanh.pop %v515
      %v532 = vadd.f32 %v516, 1.0
      %v533 = vadd.f32 %v517, 1.0
      %v534 = vadd.f32 %v518, 1.0
      %v535 = vadd.f32 %v519, 1.0
      %v536 = vadd.f32 %v520, 1.0
      %v537 = vadd.f32 %v521, 1.0
      %v538 = vadd.f32 %v522, 1.0
      %v539 = vadd.f32 %v523, 1.0
      %v540 = vadd.f32 %v524, 1.0
      %v541 = vadd.f32 %v525, 1.0
      %v542 = vadd.f32 %v526, 1.0
      %v543 = vadd.f32 %v527, 1.0
      %v544 = vadd.f32 %v528, 1.0
      %v545 = vadd.f32 %v529, 1.0
      %v546 = vadd.f32 %v530, 1.0
      %v547 = vadd.f32 %v531, 1.0
      %v548 = vmul.f32 %v532, 0.5
      %v549 = vmul.f32 %v533, 0.5
      %v550 = vmul.f32 %v534, 0.5
      %v551 = vmul.f32 %v535, 0.5
      %v552 = vmul.f32 %v536, 0.5
      %v553 = vmul.f32 %v537, 0.5
      %v554 = vmul.f32 %v538, 0.5
      %v555 = vmul.f32 %v539, 0.5
      %v556 = vmul.f32 %v540, 0.5
      %v557 = vmul.f32 %v541, 0.5
      %v558 = vmul.f32 %v542, 0.5
      %v559 = vmul.f32 %v543, 0.5
      %v560 = vmul.f32 %v544, 0.5
      %v561 = vmul.f32 %v545, 0.5
      %v562 = vmul.f32 %v546, 0.5
      %v563 = vmul.f32 %v547, 0.5
      %v564 = vmul.f32 %v388, %v548
      %v565 = vmul.f32 %v417, %v549
      %v566 = vmul.f32 %v390, %v550
      %v567 = vmul.f32 %v419, %v551
      %v568 = vmul.f32 %v393, %v552
      %v569 = vmul.f32 %v422, %v553
      %v570 = vmul.f32 %v395, %v554
      %v571 = vmul.f32 %v424, %v555
      %v572 = vmul.f32 %v398, %v556
      %v573 = vmul.f32 %v427, %v557
      %v574 = vmul.f32 %v400, %v558
      %v575 = vmul.f32 %v429, %v559
      %v576 = vmul.f32 %v403, %v560
      %v577 = vmul.f32 %v432, %v561
      %v578 = vmul.f32 %v405, %v562
      %v579 = vmul.f32 %v434, %v563
      %v580 = vld [vmem:[%s3] sm:$0xf]
      %v581 = vld [vmem:[%s3 + $0x4] sm:$0xf]
      %v582 = vld [vmem:[%s3 + $0x8] sm:$0xf]
      %v583 = vld [vmem:[%s3 + $0xc] sm:$0xf]
      %v584 = vld [vmem:[%s3 + $0x10] sm:$0xf]
      %v585 = vld [vmem:[%s3 + $0x14] sm:$0xf]
      %v586 = vld [vmem:[%s3 + $0x18] sm:$0xf]
      %v587 = vld [vmem:[%s3 + $0x1c] sm:$0xf]
      %v588 = vpack.c.bf16 %v566, %v564
      %v589 = vpack.c.bf16 %v567, %v565
      %v590 = vpack.c.bf16 %v570, %v568
      %v591 = vpack.c.bf16 %v571, %v569
      %v592 = vpack.c.bf16 %v574, %v572
      %v593 = vpack.c.bf16 %v575, %v573
      %v594 = vpack.c.bf16 %v578, %v576
      %v595 = vpack.c.bf16 %v579, %v577
      %v596 = vld [vmem:[%s4] sm:$0xff]
      %v597 = vld [vmem:[%s4 + $0x8] sm:$0xff]
      %v598 = vld [vmem:[%s4 + $0x10] sm:$0xff]
      %v599 = vld [vmem:[%s4 + $0x18] sm:$0xff]
      %v600 = vld [vmem:[%s4 + $0x20] sm:$0xff]
      %v601 = vld [vmem:[%s4 + $0x28] sm:$0xff]
      %v602 = vld [vmem:[%s4 + $0x30] sm:$0xff]
      %v603 = vld [vmem:[%s4 + $0x38] sm:$0xff]
      %605 = vset.pattern.permute.xlu0 0
      %606 = vperm.xlu0 %605, %v596
      %v607 = vpop.permute.xlu0 %606
      %610 = vset.pattern.permute.xlu0 0
      %611 = vperm.xlu0 %610, %v597
      %v612 = vpop.permute.xlu0 %611
      %615 = vset.pattern.permute.xlu0 0
      %616 = vperm.xlu0 %615, %v598
      %v617 = vpop.permute.xlu0 %616
      %620 = vset.pattern.permute.xlu0 0
      %621 = vperm.xlu0 %620, %v599
      %v622 = vpop.permute.xlu0 %621
      %625 = vset.pattern.permute.xlu0 0
      %626 = vperm.xlu0 %625, %v600
      %v627 = vpop.permute.xlu0 %626
      %630 = vset.pattern.permute.xlu0 0
      %631 = vperm.xlu0 %630, %v601
      %v632 = vpop.permute.xlu0 %631
      %635 = vset.pattern.permute.xlu0 0
      %636 = vperm.xlu0 %635, %v602
      %v637 = vpop.permute.xlu0 %636
      %640 = vset.pattern.permute.xlu0 0
      %641 = vperm.xlu0 %640, %v603
      %v642 = vpop.permute.xlu0 %641
      %v652 = vunpack.c.l.b16 %v580
      %v653 = vunpack.c.l.b16 %v581
      %v654 = vunpack.c.l.b16 %v582
      %v655 = vunpack.c.l.b16 %v583
      %v656 = vunpack.c.l.b16 %v584
      %v657 = vunpack.c.l.b16 %v585
      %v658 = vunpack.c.l.b16 %v586
      %v659 = vunpack.c.l.b16 %v587
      %v660 = vpack.c.b16 %v653, %v652
      %v661 = vpack.c.b16 %v655, %v654
      %v662 = vpack.c.b16 %v657, %v656
      %v663 = vpack.c.b16 %v659, %v658
      %v665 = vsel %vm365, %v660, 0
      %v668 = vsel %vm365, %v661, 0
      %v671 = vsel %vm365, %v662, 0
      %v674 = vsel %vm365, %v663, 0
      %676 = vmatpush.bf16.msra.mxu0 0
      %677 = vmatpush.bf16.msra.mxu0 0
      %678 = vmatpush.bf16.msra.mxu0 0
      %679 = vmatpush.bf16.msra.mxu0 0
      %680 = vmatpush.bf16.msra.mxu0 %v594
      %681 = vmatpush.bf16.msra.mxu0 %v592
      %682 = vmatpush.bf16.msra.mxu0 %v590
      %683 = vmatpush.bf16.msra.mxu0 %v588
      %684 = vmatmul.bf16.gmra.mxu0 %v665
      %v685 = vpop.f32.mrf.mxu0
      %v686 = vadd.f32 %v607, %v685
      %v687 = vpop.f32.mrf.mxu0
      %v688 = vadd.f32 %v612, %v687
      %689 = vmatmul.bf16.gmra.mxu0 %v668
      %v690 = vpop.f32.mrf.mxu0
      %v691 = vadd.f32 %v617, %v690
      %v692 = vpop.f32.mrf.mxu0
      %v693 = vadd.f32 %v622, %v692
      %694 = vmatmul.bf16.gmra.mxu0 %v671
      %v695 = vpop.f32.mrf.mxu0
      %v696 = vadd.f32 %v627, %v695
      %v697 = vpop.f32.mrf.mxu0
      %v698 = vadd.f32 %v632, %v697
      %699 = vmatmul.bf16.gmra.mxu0 %v674
      %v700 = vpop.f32.mrf.mxu0
      %v701 = vadd.f32 %v637, %v700
      %v702 = vpop.f32.mrf.mxu0
      %v703 = vadd.f32 %v642, %v702
      %704 = vdwg.mxu0
      %705 = vmatpush.bf16.msra.mxu0 0
      %706 = vmatpush.bf16.msra.mxu0 0
      %707 = vmatpush.bf16.msra.mxu0 0
      %708 = vmatpush.bf16.msra.mxu0 0
      %709 = vmatpush.bf16.msra.mxu0 %v595
      %710 = vmatpush.bf16.msra.mxu0 %v593
      %711 = vmatpush.bf16.msra.mxu0 %v591
      %712 = vmatpush.bf16.msra.mxu0 %v589
      %713 = vmatmul.bf16.gmra.mxu0 %v665
      %v714 = vpop.f32.mrf.mxu0
      %v715 = vadd.f32 %v607, %v714
      %v716 = vpop.f32.mrf.mxu0
      %v717 = vadd.f32 %v612, %v716
      %718 = vmatmul.bf16.gmra.mxu0 %v668
      %v719 = vpop.f32.mrf.mxu0
      %v720 = vadd.f32 %v617, %v719
      %v721 = vpop.f32.mrf.mxu0
      %v722 = vadd.f32 %v622, %v721
      %723 = vmatmul.bf16.gmra.mxu0 %v671
      %v724 = vpop.f32.mrf.mxu0
      %v725 = vadd.f32 %v627, %v724
      %v726 = vpop.f32.mrf.mxu0
      %v727 = vadd.f32 %v632, %v726
      %728 = vmatmul.bf16.gmra.mxu0 %v674
      %v729 = vpop.f32.mrf.mxu0
      %v730 = vadd.f32 %v637, %v729
      %v731 = vpop.f32.mrf.mxu0
      %v732 = vadd.f32 %v642, %v731
      %733 = vdwg.mxu0
      %v734 = vmax.f32 %v686, -0.01
      %v735 = vmax.f32 %v715, -0.01
      %v736 = vmax.f32 %v688, -0.01
      %v737 = vmax.f32 %v717, -0.01
      %v738 = vmax.f32 %v691, -0.01
      %v739 = vmax.f32 %v720, -0.01
      %v740 = vmax.f32 %v693, -0.01
      %v741 = vmax.f32 %v722, -0.01
      %v742 = vmax.f32 %v696, -0.01
      %v743 = vmax.f32 %v725, -0.01
      %v744 = vmax.f32 %v698, -0.01
      %v745 = vmax.f32 %v727, -0.01
      %v746 = vmax.f32 %v701, -0.01
      %v747 = vmax.f32 %v730, -0.01
      %v748 = vmax.f32 %v703, -0.01
      %v749 = vmax.f32 %v732, -0.01
      %v750 = vmin.f32 %v734, 0.01
      %v751 = vmin.f32 %v735, 0.01
      %v752 = vmin.f32 %v736, 0.01
      %v753 = vmin.f32 %v737, 0.01
      %v754 = vmin.f32 %v738, 0.01
      %v755 = vmin.f32 %v739, 0.01
      %v756 = vmin.f32 %v740, 0.01
      %v757 = vmin.f32 %v741, 0.01
      %v758 = vmin.f32 %v742, 0.01
      %v759 = vmin.f32 %v743, 0.01
      %v760 = vmin.f32 %v744, 0.01
      %v761 = vmin.f32 %v745, 0.01
      %v762 = vmin.f32 %v746, 0.01
      %v763 = vmin.f32 %v747, 0.01
      %v764 = vmin.f32 %v748, 0.01
      %v765 = vmin.f32 %v749, 0.01
      %v766 = vsub.f32 %v686, %v750
      %v767 = vsub.f32 %v715, %v751
      %v768 = vsub.f32 %v688, %v752
      %v769 = vsub.f32 %v717, %v753
      %v770 = vsub.f32 %v691, %v754
      %v771 = vsub.f32 %v720, %v755
      %v772 = vsub.f32 %v693, %v756
      %v773 = vsub.f32 %v722, %v757
      %v774 = vsub.f32 %v696, %v758
      %v775 = vsub.f32 %v725, %v759
      %v776 = vsub.f32 %v698, %v760
      %v777 = vsub.f32 %v727, %v761
      %v778 = vsub.f32 %v701, %v762
      %v779 = vsub.f32 %v730, %v763
      %v780 = vsub.f32 %v703, %v764
      %v781 = vsub.f32 %v732, %v765
      %782 = vst [vmem:[%s262] sm:$0xff] %v766
      %783 = vst [vmem:[%s262 + $0x8] sm:$0xff] %v767
      %784 = vst [vmem:[%s262 + $0x10] sm:$0xff] %v768
      %785 = vst [vmem:[%s262 + $0x18] sm:$0xff] %v769
      %786 = vst [vmem:[%s262 + $0x20] sm:$0xff] %v770
      %787 = vst [vmem:[%s262 + $0x28] sm:$0xff] %v771
      %788 = vst [vmem:[%s262 + $0x30] sm:$0xff] %v772
      %789 = vst [vmem:[%s262 + $0x38] sm:$0xff] %v773
      %790 = vst [vmem:[%s262 + $0x40] sm:$0xff] %v774
      %791 = vst [vmem:[%s262 + $0x48] sm:$0xff] %v775
      %792 = vst [vmem:[%s262 + $0x50] sm:$0xff] %v776
      %793 = vst [vmem:[%s262 + $0x58] sm:$0xff] %v777
      %794 = vst [vmem:[%s262 + $0x60] sm:$0xff] %v778
      %795 = vst [vmem:[%s262 + $0x68] sm:$0xff] %v779
      %796 = vst [vmem:[%s262 + $0x70] sm:$0xff] %v780
      %797 = vst [vmem:[%s262 + $0x78] sm:$0xff] %v781
      %s798 = smul.u32 2, %s21
      %p799 = scmp.lt.s32.totalorder %s20, 1
      %s800 = scalar_select %p799, %s20, 1
      %p801 = scmp.lt.s32.totalorder %s798, 1
      %s802 = scalar_select %p801, %s798, 1
      %s803 = smul.addr %s800, 16
      %s804 = sadd.s32 %s802, %s803
      %s805 = smul.addr %s804, 8
      %s806 = scalar_lea.vmem %s5, %s805
      // Predicated region
      $region41: #{adaptive_fourier_2d.1} parent=39 // pred_check
        %p807 = pneg %p160
      $region42: #{adaptive_fourier_2d.1} parent=39 // pred_check_branch
        %809 = sbr.rel (%p807) target = $region44
      $region43: #{adaptive_fourier_2d.1} parent=39 // pred_region
        %s810 = smul.u32 2, %s21
      $region44: #{adaptive_fourier_2d.1} parent=39 // pred_fallthru
        _
    $region40: #{adaptive_fourier_2d.1} parent=5 // pred_fallthru
      _
    %p811 = scmp.le.s32.totalorder 2, %s11
    // Predicated region
    $region45: #{adaptive_fourier_2d.1} parent=5 // pred_check
      %p812 = pneg %p811
    $region46: #{adaptive_fourier_2d.1} parent=5 // pred_check_branch
      %814 = sbr.rel (%p812) target = $region48
    $region47: #{adaptive_fourier_2d.1} parent=5 // pred_region
      %s815 = ssub.s32 %s11, 2
      // Predicated region
      $region49: #{adaptive_fourier_2d.1} parent=47 // pred_check
        %p816 = pneg %p166
      $region50: #{adaptive_fourier_2d.1} parent=47 // pred_check_branch
        %818 = sbr.rel (%p816) target = $region52
      $region51: #{adaptive_fourier_2d.1} parent=47 // pred_region
        %s819 = smul.u32 2, %s23
        %p820 = scmp.lt.s32.totalorder %s22, 1
        %s821 = scalar_select %p820, %s22, 1
        %p822 = scmp.lt.s32.totalorder %s819, 1
        %s823 = scalar_select %p822, %s819, 1
        %s824 = smul.addr %s821, 16
        %s825 = sadd.s32 %s823, %s824
        %s826 = smul.addr %s825, 8
        %s827 = scalar_lea.vmem %s5, %s826
      $region52: #{adaptive_fourier_2d.1} parent=47 // pred_fallthru
        _
    $region48: #{adaptive_fourier_2d.1} parent=5 // pred_fallthru
      _
  $region6: #{adaptive_fourier_2d.1} parent=0 // loop_footer
    %s15 = sadd.s32 1, %s11
  $region7: #{adaptive_fourier_2d.1} parent=0 // loop_footer_branch
    %10 = sbr.rel target = $region3
  $region8: #{adaptive_fourier_2d.1} parent=0 // loop_exit
    _

// kernel: reverse.1
$region0: #{reverse.1}
  #allocation0 [shape = 's32[1]{0}', space=sflag, size = 0x4, scoped, tag = 'scoped memory for reverse.1']
  %s0 = inlined_call_operand.vmem [shape: f32[2,32,16,7], index: 0, kind: input, shape index: {}]
  %s1 = inlined_call_operand.vmem [shape: f32[2,32,16,7], index: 1, kind: output, shape index: {}]
  %s2 = scalar_lea.vmem %s0, 96
  %v3 = vld [vmem:[%s2] sm:$0xff]
  %4 = vst [vmem:[%s1] sm:$0xff] %v3
  %s5 = scalar_lea.vmem %s0, 208
  %v6 = vld [vmem:[%s5] sm:$0xff]
  %s7 = scalar_lea.vmem %s1, 112
  %8 = vst [vmem:[%s7] sm:$0xff] %v6
  %s9 = scalar_lea.vmem %s0, 80
  %v10 = vld [vmem:[%s9] sm:$0xff]
  %s11 = scalar_lea.vmem %s1, 16
  %12 = vst [vmem:[%s11] sm:$0xff] %v10
  %s13 = scalar_lea.vmem %s0, 192
  %v14 = vld [vmem:[%s13] sm:$0xff]
  %s15 = scalar_lea.vmem %s1, 128
  %16 = vst [vmem:[%s15] sm:$0xff] %v14
  %s17 = scalar_lea.vmem %s0, 64
  %v18 = vld [vmem:[%s17] sm:$0xff]
  %s19 = scalar_lea.vmem %s1, 32
  %20 = vst [vmem:[%s19] sm:$0xff] %v18
  %s21 = scalar_lea.vmem %s0, 176
  %v22 = vld [vmem:[%s21] sm:$0xff]
  %s23 = scalar_lea.vmem %s1, 144
  %24 = vst [vmem:[%s23] sm:$0xff] %v22
  %s25 = scalar_lea.vmem %s0, 48
  %v26 = vld [vmem:[%s25] sm:$0xff]
  %s27 = scalar_lea.vmem %s1, 48
  %28 = vst [vmem:[%s27] sm:$0xff] %v26
  %s29 = scalar_lea.vmem %s0, 160
  %v30 = vld [vmem:[%s29] sm:$0xff]
  %s31 = scalar_lea.vmem %s1, 160
  %32 = vst [vmem:[%s31] sm:$0xff] %v30
  %s33 = scalar_lea.vmem %s0, 32
  %v34 = vld [vmem:[%s33] sm:$0xff]
  %s35 = scalar_lea.vmem %s1, 64
  %36 = vst [vmem:[%s35] sm:$0xff] %v34
  %s37 = scalar_lea.vmem %s0, 144
  %v38 = vld [vmem:[%s37] sm:$0xff]
  %s39 = scalar_lea.vmem %s1, 176
  %40 = vst [vmem:[%s39] sm:$0xff] %v38
  %s41 = scalar_lea.vmem %s0, 16
  %v42 = vld [vmem:[%s41] sm:$0xff]
  %s43 = scalar_lea.vmem %s1, 80
  %44 = vst [vmem:[%s43] sm:$0xff] %v42
  %s45 = scalar_lea.vmem %s0, 128
  %v46 = vld [vmem:[%s45] sm:$0xff]
  %s47 = scalar_lea.vmem %s1, 192
  %48 = vst [vmem:[%s47] sm:$0xff] %v46
  %v49 = vld [vmem:[%s0] sm:$0xff]
  %s50 = scalar_lea.vmem %s1, 96
  %51 = vst [vmem:[%s50] sm:$0xff] %v49
  %s52 = scalar_lea.vmem %s0, 112
  %v53 = vld [vmem:[%s52] sm:$0xff]
  %s54 = scalar_lea.vmem %s1, 208
  %55 = vst [vmem:[%s54] sm:$0xff] %v53
  %s56 = scalar_lea.vmem %s0, 104
  %v57 = vld [vmem:[%s56] sm:$0xff]
  %s58 = scalar_lea.vmem %s1, 8
  %59 = vst [vmem:[%s58] sm:$0xff] %v57
  %s60 = scalar_lea.vmem %s0, 216
  %v61 = vld [vmem:[%s60] sm:$0xff]
  %s62 = scalar_lea.vmem %s1, 120
  %63 = vst [vmem:[%s62] sm:$0xff] %v61
  %s64 = scalar_lea.vmem %s0, 88
  %v65 = vld [vmem:[%s64] sm:$0xff]
  %s66 = scalar_lea.vmem %s1, 24
  %67 = vst [vmem:[%s66] sm:$0xff] %v65
  %s68 = scalar_lea.vmem %s0, 200
  %v69 = vld [vmem:[%s68] sm:$0xff]
  %s70 = scalar_lea.vmem %s1, 136
  %71 = vst [vmem:[%s70] sm:$0xff] %v69
  %s72 = scalar_lea.vmem %s0, 72
  %v73 = vld [vmem:[%s72] sm:$0xff]
  %s74 = scalar_lea.vmem %s1, 40
  %75 = vst [vmem:[%s74] sm:$0xff] %v73
  %s76 = scalar_lea.vmem %s0, 184
  %v77 = vld [vmem:[%s76] sm:$0xff]
  %s78 = scalar_lea.vmem %s1, 152
  %79 = vst [vmem:[%s78] sm:$0xff] %v77
  %s80 = scalar_lea.vmem %s0, 56
  %v81 = vld [vmem:[%s80] sm:$0xff]
  %s82 = scalar_lea.vmem %s1, 56
  %83 = vst [vmem:[%s82] sm:$0xff] %v81
  %s84 = scalar_lea.vmem %s0, 168
  %v85 = vld [vmem:[%s84] sm:$0xff]
  %s86 = scalar_lea.vmem %s1, 168
  %87 = vst [vmem:[%s86] sm:$0xff] %v85
  %s88 = scalar_lea.vmem %s0, 40
  %v89 = vld [vmem:[%s88] sm:$0xff]
  %s90 = scalar_lea.vmem %s1, 72
  %91 = vst [vmem:[%s90] sm:$0xff] %v89
  %s92 = scalar_lea.vmem %s0, 152
  %v93 = vld [vmem:[%s92] sm:$0xff]
  %s94 = scalar_lea.vmem %s1, 184
  %95 = vst [vmem:[%s94] sm:$0xff] %v93
  %s96 = scalar_lea.vmem %s0, 24
  %v97 = vld [vmem:[%s96] sm:$0xff]
  %s98 = scalar_lea.vmem %s1, 88
  %99 = vst [vmem:[%s98] sm:$0xff] %v97
  %s100 = scalar_lea.vmem %s0, 136
  %v101 = vld [vmem:[%s100] sm:$0xff]
  %s102 = scalar_lea.vmem %s1, 200
  %103 = vst [vmem:[%s102] sm:$0xff] %v101
  %s104 = scalar_lea.vmem %s0, 8
  %v105 = vld [vmem:[%s104] sm:$0xff]
  %s106 = scalar_lea.vmem %s1, 104
  %107 = vst [vmem:[%s106] sm:$0xff] %v105
  %s108 = scalar_lea.vmem %s0, 120
  %v109 = vld [vmem:[%s108] sm:$0xff]
  %s110 = scalar_lea.vmem %s1, 216
  %111 = vst [vmem:[%s110] sm:$0xff] %v109

</llo_original>
